<compile_context>
chip_gen: v7x
topology: tpu7x:2x2x1
jax: 0.10.0
libtpu: 0.0.40
codegen_flags: <defaults>
</compile_context>

<pallas_src>
import jax
import jax.numpy as jnp
from jax.experimental import pallas as pl
from jax.experimental.pallas import tpu as pltpu


MIN_E = 0.4
MAX_E = 1.1

_SUBLANES = 8
_MAX_B_TILE = 2048        # per-step X tile: 2048*32*4 = 256 KiB (double-buffered 512 KiB)
_TARGET_GRID_STEPS = 4    # keep >= ~4 grid steps for large B (megacore / v7x 2 TCs)


def _round_up(x, m):
    return ((x + m - 1) // m) * m


def _deep_sq_kernel(x_ref, w0_ref, b0_ref, w1_ref, b1_ref, o_ref):
    # fc_0: X @ W0 + b0   (all f32, MXU accumulate in f32)
    x = x_ref[...]
    h = jnp.dot(x, w0_ref[...], preferred_element_type=jnp.float32) + b0_ref[...]
    # LeakyReLU(0.2) on the VPU.
    h = jnp.where(h > 0, h, 0.2 * h)
    # fc_1: h @ W1 + b1
    y = jnp.dot(h, w1_ref[...], preferred_element_type=jnp.float32) + b1_ref[...]
    # sigmoid(y) * max_e + min_e — fused epilogue (EUP exp is free filler).
    o_ref[...] = (jax.nn.sigmoid(y) * MAX_E + MIN_E).astype(o_ref.dtype)


@jax.jit
def deep_sq_shape(x, w0, b0, w1, b1):
    """Fused DeepSQShape forward.

    x  : (B, D)   float32
    w0 : (D, D)   float32   (transposed PyTorch fc_0.weight)
    b0 : (1, D)   float32
    w1 : (D, M2)  float32   (transposed PyTorch fc_1.weight)
    b1 : (1, M2)  float32
    returns (B, M2) float32
    """
    B, D = x.shape
    M2 = w1.shape[1]

    # Batch tile: multiple of 8 sublanes, capped at 2048 rows, and sized so a
    # large batch still yields several grid steps for the parallel axis.
    tb = min(_MAX_B_TILE,
             max(_SUBLANES, _round_up(pl.cdiv(B, _TARGET_GRID_STEPS), _SUBLANES)))
    grid = (pl.cdiv(B, tb),)   # ragged last block handled by Pallas masking

    return pl.pallas_call(
        _deep_sq_kernel,
        out_shape=jax.ShapeDtypeStruct((B, M2), jnp.float32),
        grid=grid,
        in_specs=[
            # X streams tile-by-tile over the batch grid axis.
            pl.BlockSpec((tb, D), lambda i: (i, 0)),
            # Weights / biases: constant index_map -> VMEM-resident, DMA'd once.
            pl.BlockSpec((D, D), lambda i: (0, 0)),
            pl.BlockSpec((1, D), lambda i: (0, 0)),
            pl.BlockSpec((D, M2), lambda i: (0, 0)),
            pl.BlockSpec((1, M2), lambda i: (0, 0)),
        ],
        # Un-padded (tb, M2) output block: M2 equals the full array dim, so this
        # is legal and avoids 8x padded HBM writeback.
        out_specs=pl.BlockSpec((tb, M2), lambda i: (i, 0)),
        compiler_params=pltpu.CompilerParams(
            dimension_semantics=("parallel",),
        ),
    )(x, w0, b0, w1, b1)


def _reference(x, w0, b0, w1, b1):
    h = x @ w0 + b0
    h = jnp.where(h > 0, h, 0.2 * h)
    y = h @ w1 + b1
    return jax.nn.sigmoid(y) * MAX_E + MIN_E


if __name__ == "__main__":
    # Small shapes consistent with the module: B=2, input_dims=32, n_primitives=8.
    B = 2
    D = 32           # fe.feature_shape
    n_primitives = 8
    M2 = n_primitives * 2

    key = jax.random.PRNGKey(0)
    kx, k0, kb0, k1, kb1 = jax.random.split(key, 5)

    x = jax.random.normal(kx, (B, D), dtype=jnp.float32)
    # Deterministic parameter init (synthetic, not a checkpoint load).
    w0 = jax.random.normal(k0, (D, D), dtype=jnp.float32) * (1.0 / jnp.sqrt(D))
    b0 = jax.random.normal(kb0, (1, D), dtype=jnp.float32) * 0.01
    w1 = jax.random.normal(k1, (D, M2), dtype=jnp.float32) * (1.0 / jnp.sqrt(D))
    b1 = jax.random.normal(kb1, (1, M2), dtype=jnp.float32) * 0.01

    out = jax.block_until_ready(deep_sq_shape(x, w0, b0, w1, b1))
    ref = _reference(x, w0, b0, w1, b1)
    assert out.shape == (B, M2)
    # Everything is f32 now; small tolerance covers MXU vs. XLA dot precision
    # defaults on the bounded sigmoid output.
    assert jnp.allclose(out, ref, atol=1e-2, rtol=1e-2)

    # Exercise the multi-step batch grid path (including a ragged last block).
    B_big = 1000  # not a multiple of the tile size
    x_big = jax.random.normal(jax.random.PRNGKey(1), (B_big, D), dtype=jnp.float32)
    out_big = jax.block_until_ready(deep_sq_shape(x_big, w0, b0, w1, b1))
    ref_big = _reference(x_big, w0, b0, w1, b1)
    assert out_big.shape == (B_big, M2)
    assert jnp.allclose(out_big, ref_big, atol=1e-2, rtol=1e-2)

    print("KERNEL_OK")
</pallas_src>

<mosaic_0001>
module attributes {stable_mosaic.version = 11 : i64} {
  func.func @_deep_sq_kernel(%arg0: i32, %arg1: memref<8x32xf32, #tpu.memory_space<vmem>>, %arg2: memref<32x32xf32, #tpu.memory_space<vmem>>, %arg3: memref<1x32xf32, #tpu.memory_space<vmem>>, %arg4: memref<32x16xf32, #tpu.memory_space<vmem>>, %arg5: memref<1x16xf32, #tpu.memory_space<vmem>>, %arg6: memref<8x16xf32, #tpu.memory_space<vmem>>) attributes {dimension_semantics = [#tpu.dimension_semantics<parallel>], iteration_bounds = array<i64: 1>, scalar_prefetch = 0 : i64, scratch_operands = 0 : i64, tpu.core_type = #tpu.core_type<tc>, window_params = [{transform_indices = @transform_0, window_bounds = array<i64: 8, 32>}, {pipeline_mode = #tpu.pipeline_mode<synchronous>, transform_indices = @transform_1, window_bounds = array<i64: 32, 32>}, {pipeline_mode = #tpu.pipeline_mode<synchronous>, transform_indices = @transform_2, window_bounds = array<i64: 1, 32>}, {pipeline_mode = #tpu.pipeline_mode<synchronous>, transform_indices = @transform_3, window_bounds = array<i64: 32, 16>}, {pipeline_mode = #tpu.pipeline_mode<synchronous>, transform_indices = @transform_4, window_bounds = array<i64: 1, 16>}, {transform_indices = @transform_5, window_bounds = array<i64: 8, 16>}]} {
    %c0 = arith.constant 0 : index
    %c0_0 = arith.constant 0 : index
    %0 = vector.load %arg1[%c0, %c0_0] : memref<8x32xf32, #tpu.memory_space<vmem>>, vector<8x32xf32>
    %c0_1 = arith.constant 0 : index
    %c0_2 = arith.constant 0 : index
    %1 = vector.load %arg2[%c0_1, %c0_2] : memref<32x32xf32, #tpu.memory_space<vmem>>, vector<32x32xf32>
    %cst = arith.constant dense<0.000000e+00> : vector<8x32xf32>
    %2 = tpu.matmul %0, %1, %cst {dimension_numbers = #tpu.dot_dimension_numbers<[1], [0], [0], [1], [0, 0, 1, 1], [], []>} : vector<8x32xf32>, vector<32x32xf32>, vector<8x32xf32> -> vector<8x32xf32>
    %c0_3 = arith.constant 0 : index
    %c0_4 = arith.constant 0 : index
    %3 = vector.load %arg3[%c0_3, %c0_4] : memref<1x32xf32, #tpu.memory_space<vmem>>, vector<1x32xf32>
    %4 = vector.broadcast %3 : vector<1x32xf32> to vector<8x32xf32>
    %5 = arith.addf %2, %4 : vector<8x32xf32>
    %cst_5 = arith.constant 0.000000e+00 : f32
    %6 = vector.broadcast %cst_5 : f32 to vector<8x32xf32>
    %7 = arith.cmpf ogt, %5, %6 : vector<8x32xf32>
    %cst_6 = arith.constant 2.000000e-01 : f32
    %8 = vector.broadcast %cst_6 : f32 to vector<8x32xf32>
    %9 = arith.mulf %8, %5 : vector<8x32xf32>
    %10 = arith.select %7, %5, %9 : vector<8x32xi1>, vector<8x32xf32>
    %c0_7 = arith.constant 0 : index
    %c0_8 = arith.constant 0 : index
    %11 = vector.load %arg4[%c0_7, %c0_8] : memref<32x16xf32, #tpu.memory_space<vmem>>, vector<32x16xf32>
    %cst_9 = arith.constant dense<0.000000e+00> : vector<8x16xf32>
    %12 = tpu.matmul %10, %11, %cst_9 {dimension_numbers = #tpu.dot_dimension_numbers<[1], [0], [0], [1], [0, 0, 1, 1], [], []>} : vector<8x32xf32>, vector<32x16xf32>, vector<8x16xf32> -> vector<8x16xf32>
    %c0_10 = arith.constant 0 : index
    %c0_11 = arith.constant 0 : index
    %13 = vector.load %arg5[%c0_10, %c0_11] : memref<1x16xf32, #tpu.memory_space<vmem>>, vector<1x16xf32>
    %14 = vector.broadcast %13 : vector<1x16xf32> to vector<8x16xf32>
    %15 = arith.addf %12, %14 : vector<8x16xf32>
    %16 = arith.negf %15 : vector<8x16xf32>
    %17 = math.exp %16 : vector<8x16xf32>
    %cst_12 = arith.constant 1.000000e+00 : f32
    %18 = vector.broadcast %cst_12 : f32 to vector<8x16xf32>
    %19 = arith.addf %18, %17 : vector<8x16xf32>
    %20 = arith.divf %18, %19 : vector<8x16xf32>
    %cst_13 = arith.constant 1.100000e+00 : f32
    %21 = vector.broadcast %cst_13 : f32 to vector<8x16xf32>
    %22 = arith.mulf %20, %21 : vector<8x16xf32>
    %cst_14 = arith.constant 4.000000e-01 : f32
    %23 = vector.broadcast %cst_14 : f32 to vector<8x16xf32>
    %24 = arith.addf %22, %23 : vector<8x16xf32>
    %c0_15 = arith.constant 0 : index
    %c0_16 = arith.constant 0 : index
    %25 = vector.load %arg6[%c0_15, %c0_16] : memref<8x16xf32, #tpu.memory_space<vmem>>, vector<8x16xf32>
    tpu.vector_store %arg6[%c0_15, %c0_16], %24 {strides = array<i32>} : memref<8x16xf32, #tpu.memory_space<vmem>>, vector<8x16xf32>,
    return
  }
  func.func @transform_0(%arg0: i32) -> (i32, i32) {
    %c0_i32 = arith.constant 0 : i32
    %c0_i32_0 = arith.constant 0 : i32
    return %arg0, %c0_i32 : i32, i32
  }
  func.func @transform_1(%arg0: i32) -> (i32, i32) {
    %c0_i32 = arith.constant 0 : i32
    %c0_i32_0 = arith.constant 0 : i32
    %c0_i32_1 = arith.constant 0 : i32
    return %c0_i32, %c0_i32_0 : i32, i32
  }
  func.func @transform_2(%arg0: i32) -> (i32, i32) {
    %c0_i32 = arith.constant 0 : i32
    %c0_i32_0 = arith.constant 0 : i32
    %c0_i32_1 = arith.constant 0 : i32
    return %c0_i32, %c0_i32_0 : i32, i32
  }
  func.func @transform_3(%arg0: i32) -> (i32, i32) {
    %c0_i32 = arith.constant 0 : i32
    %c0_i32_0 = arith.constant 0 : i32
    %c0_i32_1 = arith.constant 0 : i32
    return %c0_i32, %c0_i32_0 : i32, i32
  }
  func.func @transform_4(%arg0: i32) -> (i32, i32) {
    %c0_i32 = arith.constant 0 : i32
    %c0_i32_0 = arith.constant 0 : i32
    %c0_i32_1 = arith.constant 0 : i32
    return %c0_i32, %c0_i32_0 : i32, i32
  }
  func.func @transform_5(%arg0: i32) -> (i32, i32) {
    %c0_i32 = arith.constant 0 : i32
    %c0_i32_0 = arith.constant 0 : i32
    return %arg0, %c0_i32 : i32, i32
  }
}

</mosaic_0001>

<llo_original>
// kernel: deep_sq_shape.1
$region0: #{deep_sq_shape.1}
  #allocation0 [shape = 'u32[]', space=smem, size = 0x4, offset = 0x4, fixed_abs, tag = 'smem constant byte address 0x4 - core index']
  #allocation1 [shape = 'u32[144,128]{1,0:T(1,128)}', space=vmem, size = 0x12000, scoped, tag = 'internal scratch']
  %s0 = inlined_call_operand.vmem [shape: f32[2,32], index: 0, kind: input, shape index: {}]
  %s1 = inlined_call_operand.vmem [shape: f32[32,32], index: 1, kind: input, shape index: {}]
  %s2 = inlined_call_operand.vmem [shape: f32[1,32], index: 2, kind: input, shape index: {}]
  %s3 = inlined_call_operand.vmem [shape: f32[32,16], index: 3, kind: input, shape index: {}]
  %s4 = inlined_call_operand.vmem [shape: f32[1,16], index: 4, kind: input, shape index: {}]
  %s5 = inlined_call_operand.hbm [shape: f32[2,16], index: 5, kind: output, shape index: {}]
  %s6 = sld [smem:[#allocation0]]
  $region30: #{deep_sq_shape.1} parent=0
    _
  %s8 = ssub.s32 1, %s6
  %s9 = scalar_select 0, %s8, %s6
  $region1: #{deep_sq_shape.1} parent=0
    #allocation2 [shape = 'u8[4096]{0}', space=vmem, size = 0x1000, scoped, tag = 'output window, operand 0, single buffered']
    #allocation3 [shape = 's32[1]{0}', space=sflag, size = 0x4, scoped, tag = 'scoped memory for deep_sq_shape.1']
    %10 = vsyncpa [#allocation3], 0
    // Predicated region
    $region2: #{deep_sq_shape.1} parent=1 // pred_check
      _
    $region3: #{deep_sq_shape.1} parent=1 // pred_check_branch
      %12 = sbr.rel (0) target = $region5
    $region4: #{deep_sq_shape.1} parent=1 // pred_region
      _
    $region5: #{deep_sq_shape.1} parent=1 // pred_fallthru
      _
    // Predicated region
    $region6: #{deep_sq_shape.1} parent=1 // pred_check
      _
    $region7: #{deep_sq_shape.1} parent=1 // pred_check_branch
      %14 = sbr.rel (0) target = $region9
    $region8: #{deep_sq_shape.1} parent=1 // pred_region
      _
    $region9: #{deep_sq_shape.1} parent=1 // pred_fallthru
      _
    // Predicated region
    $region10: #{deep_sq_shape.1} parent=1 // pred_check
      _
    $region11: #{deep_sq_shape.1} parent=1 // pred_check_branch
      %16 = sbr.rel (0) target = $region13
    $region12: #{deep_sq_shape.1} parent=1 // pred_region
      _
    $region13: #{deep_sq_shape.1} parent=1 // pred_fallthru
      _
    // Predicated region
    $region14: #{deep_sq_shape.1} parent=1 // pred_check
      _
    $region15: #{deep_sq_shape.1} parent=1 // pred_check_branch
      %18 = sbr.rel (0) target = $region17
    $region16: #{deep_sq_shape.1} parent=1 // pred_region
      _
    $region17: #{deep_sq_shape.1} parent=1 // pred_fallthru
      _
    // Predicated region
    $region18: #{deep_sq_shape.1} parent=1 // pred_check
      _
    $region19: #{deep_sq_shape.1} parent=1 // pred_check_branch
      %20 = sbr.rel (0) target = $region21
    $region20: #{deep_sq_shape.1} parent=1 // pred_region
      _
    $region21: #{deep_sq_shape.1} parent=1 // pred_fallthru
      _
    %v21 = vld [vmem:[%s0] sm:$0xff]
    %v22 = vld [vmem:[%s1] sm:$0xff]
    %v23 = vld [vmem:[%s1 + $0x8] sm:$0xff]
    %v24 = vld [vmem:[%s1 + $0x10] sm:$0xff]
    %v25 = vld [vmem:[%s1 + $0x18] sm:$0xff]
    %v26 = vld [vmem:[%s2] sm:$0x1]
    %v28 = vlaneseq
    %v29 = vshrl.u32 %v28, 7
    %v30 = vsub.s32 0, %v29
    %v31 = vrot.slane %v26, %v30
    %vm33 = vcmask 261120
    %v35 = vsel %vm33, %v21, 0
    %37 = vmatprep.subr.mxu0 0.0
    %38 = vmatpush1.msra.mxu0 %v22
    %39 = vmatprep.subr.mxu0 0.0
    %40 = vmatpush1.msra.mxu0 %v23
    %41 = vmatprep.subr.mxu0 0.0
    %42 = vmatpush1.msra.mxu0 %v24
    %43 = vmatprep.subr.mxu0 0.0
    %44 = vmatpush1.msra.mxu0 %v25
    %45 = vmatprep.subr.mxu0 0.0
    %46 = vmatpush1.msra.mxu0 0.0
    %47 = vmatprep.subr.mxu0 0.0
    %48 = vmatpush1.msra.mxu0 0.0
    %49 = vmatprep.subr.mxu0 0.0
    %50 = vmatpush1.msra.mxu0 0.0
    %51 = vmatprep.subr.mxu0 0.0
    %52 = vmatpush1.msra.mxu0 0.0
    %53 = vmatprep.subr.mxu0 0.0
    %54 = vmatpush1.msra.mxu0 0.0
    %55 = vmatprep.subr.mxu0 0.0
    %56 = vmatpush1.msra.mxu0 0.0
    %57 = vmatprep.subr.mxu0 0.0
    %58 = vmatpush1.msra.mxu0 0.0
    %59 = vmatprep.subr.mxu0 0.0
    %60 = vmatpush1.msra.mxu0 0.0
    %61 = vmatprep.subr.mxu0 0.0
    %62 = vmatpush1.msra.mxu0 0.0
    %63 = vmatprep.subr.mxu0 0.0
    %64 = vmatpush1.msra.mxu0 0.0
    %65 = vmatprep.subr.mxu0 0.0
    %66 = vmatpush1.msra.mxu0 0.0
    %67 = vmatprep.subr.mxu0 0.0
    %68 = vmatpush1.msra.mxu0 0.0
    %69 = vmatprep.subr.mxu0 0.0
    %70 = vmatpush1.msra.mxu0 0.0
    %71 = vmatprep.subr.mxu0 0.0
    %72 = vmatpush1.msra.mxu0 0.0
    %73 = vmatprep.subr.mxu0 0.0
    %74 = vmatpush1.msra.mxu0 0.0
    %75 = vmatprep.subr.mxu0 0.0
    %76 = vmatpush1.msra.mxu0 0.0
    %77 = vmatprep.subr.mxu0 0.0
    %78 = vmatpush1.msra.mxu0 0.0
    %79 = vmatprep.subr.mxu0 0.0
    %80 = vmatpush1.msra.mxu0 0.0
    %81 = vmatprep.subr.mxu0 0.0
    %82 = vmatpush1.msra.mxu0 0.0
    %83 = vmatprep.subr.mxu0 0.0
    %84 = vmatpush1.msra.mxu0 0.0
    %85 = vmatprep.subr.mxu0 0.0
    %86 = vmatpush1.msra.mxu0 0.0
    %87 = vmatprep.subr.mxu0 0.0
    %88 = vmatpush1.msra.mxu0 0.0
    %89 = vmatprep.subr.mxu0 0.0
    %90 = vmatpush1.msra.mxu0 0.0
    %91 = vmatprep.subr.mxu0 0.0
    %92 = vmatpush1.msra.mxu0 0.0
    %93 = vmatprep.subr.mxu0 0.0
    %94 = vmatpush1.msra.mxu0 0.0
    %95 = vmatprep.subr.mxu0 0.0
    %96 = vmatpush1.msra.mxu0 0.0
    %97 = vmatprep.subr.mxu0 0.0
    %98 = vmatpush1.msra.mxu0 0.0
    %99 = vmatprep.subr.mxu0 0.0
    %100 = vmatpush1.msra.mxu0 0.0
    %101 = vmatprep.mubr.f32.mxu0 0.0
    %102 = vmatmul.mubr.f32.gmra.mrb[0].mxu0 %v35
    %v103 = vpop.f32.mrb[0].mxu0
    %v104 = vadd.f32 %v31, %v103
    %v105 = vpop.f32.mrb[0].mxu0
    %106 = vdwg.mxu0
    %vm107 = vcmp.gt.f32.partialorder %v104, 0.0
    %v108 = vmul.f32 %v104, 0.2
    %v109 = vsel %vm107, %v104, %v108
    %v110 = vld [vmem:[%s3] sm:$0xff]
    %v111 = vld [vmem:[%s3 + $0x8] sm:$0xff]
    %v112 = vld [vmem:[%s3 + $0x10] sm:$0xff]
    %v113 = vld [vmem:[%s3 + $0x18] sm:$0xff]
    %v114 = vld [vmem:[%s4] sm:$0x1]
    %v116 = vlaneseq
    %v117 = vshrl.u32 %v116, 7
    %v118 = vsub.s32 0, %v117
    %v119 = vrot.slane %v114, %v118
    %v122 = vsel %vm33, %v109, 0
    %124 = vmatprep.subr.mxu0 0.0
    %125 = vmatpush1.msra.mxu0 %v110
    %126 = vmatprep.subr.mxu0 0.0
    %127 = vmatpush1.msra.mxu0 %v111
    %128 = vmatprep.subr.mxu0 0.0
    %129 = vmatpush1.msra.mxu0 %v112
    %130 = vmatprep.subr.mxu0 0.0
    %131 = vmatpush1.msra.mxu0 %v113
    %132 = vmatprep.subr.mxu0 0.0
    %133 = vmatpush1.msra.mxu0 0.0
    %134 = vmatprep.subr.mxu0 0.0
    %135 = vmatpush1.msra.mxu0 0.0
    %136 = vmatprep.subr.mxu0 0.0
    %137 = vmatpush1.msra.mxu0 0.0
    %138 = vmatprep.subr.mxu0 0.0
    %139 = vmatpush1.msra.mxu0 0.0
    %140 = vmatprep.subr.mxu0 0.0
    %141 = vmatpush1.msra.mxu0 0.0
    %142 = vmatprep.subr.mxu0 0.0
    %143 = vmatpush1.msra.mxu0 0.0
    %144 = vmatprep.subr.mxu0 0.0
    %145 = vmatpush1.msra.mxu0 0.0
    %146 = vmatprep.subr.mxu0 0.0
    %147 = vmatpush1.msra.mxu0 0.0
    %148 = vmatprep.subr.mxu0 0.0
    %149 = vmatpush1.msra.mxu0 0.0
    %150 = vmatprep.subr.mxu0 0.0
    %151 = vmatpush1.msra.mxu0 0.0
    %152 = vmatprep.subr.mxu0 0.0
    %153 = vmatpush1.msra.mxu0 0.0
    %154 = vmatprep.subr.mxu0 0.0
    %155 = vmatpush1.msra.mxu0 0.0
    %156 = vmatprep.subr.mxu0 0.0
    %157 = vmatpush1.msra.mxu0 0.0
    %158 = vmatprep.subr.mxu0 0.0
    %159 = vmatpush1.msra.mxu0 0.0
    %160 = vmatprep.subr.mxu0 0.0
    %161 = vmatpush1.msra.mxu0 0.0
    %162 = vmatprep.subr.mxu0 0.0
    %163 = vmatpush1.msra.mxu0 0.0
    %164 = vmatprep.subr.mxu0 0.0
    %165 = vmatpush1.msra.mxu0 0.0
    %166 = vmatprep.subr.mxu0 0.0
    %167 = vmatpush1.msra.mxu0 0.0
    %168 = vmatprep.subr.mxu0 0.0
    %169 = vmatpush1.msra.mxu0 0.0
    %170 = vmatprep.subr.mxu0 0.0
    %171 = vmatpush1.msra.mxu0 0.0
    %172 = vmatprep.subr.mxu0 0.0
    %173 = vmatpush1.msra.mxu0 0.0
    %174 = vmatprep.subr.mxu0 0.0
    %175 = vmatpush1.msra.mxu0 0.0
    %176 = vmatprep.subr.mxu0 0.0
    %177 = vmatpush1.msra.mxu0 0.0
    %178 = vmatprep.subr.mxu0 0.0
    %179 = vmatpush1.msra.mxu0 0.0
    %180 = vmatprep.subr.mxu0 0.0
    %181 = vmatpush1.msra.mxu0 0.0
    %182 = vmatprep.subr.mxu0 0.0
    %183 = vmatpush1.msra.mxu0 0.0
    %184 = vmatprep.subr.mxu0 0.0
    %185 = vmatpush1.msra.mxu0 0.0
    %186 = vmatprep.subr.mxu0 0.0
    %187 = vmatpush1.msra.mxu0 0.0
    %188 = vmatprep.mubr.f32.mxu0 0.0
    %189 = vmatmul.mubr.f32.gmra.mrb[0].mxu0 %v122
    %v190 = vpop.f32.mrb[0].mxu0
    %v191 = vadd.f32 %v119, %v190
    %v192 = vpop.f32.mrb[0].mxu0
    %193 = vdwg.mxu0
    %v194 = vxor.u32 %v191, 2147483648
    %v195 = vmul.f32 %v194, 1.442695
    %v196 = vpow.pop %v195
    %v197 = vadd.f32 %v196, 1.0
    %v198 = vrcp.pop %v197
    %v199 = vmul.f32 1.0, %v198
    %v200 = vmul.f32 %v199, 1.1
    %v201 = vadd.f32 %v200, 0.4
    %vm202 = vcmask 130048
    %203 = vst.msk [vmem:[#allocation2] sm:$0xff] %vm202, %v201
    // Predicated region
    $region22: #{deep_sq_shape.1} parent=1 // pred_check
      _
    $region23: #{deep_sq_shape.1} parent=1 // pred_check_branch
      %205 = sbr.rel (0) target = $region25
    $region24: #{deep_sq_shape.1} parent=1 // pred_region
      %s207 = ssub.s32 128, 32
      %208 = vsyncadd [#allocation3], %s207
      %s209 = sshll.u32 [#allocation2], 4
      %s210 = int_to_ptr.vmem [resolvable:$true] %s209
      %215 = dma.vmem_to_hbm [thread:$0]  %s210, 32, %s5, [#allocation3], 32, 32, 2
    $region25: #{deep_sq_shape.1} parent=1 // pred_fallthru
      _
    // Predicated region
    $region26: #{deep_sq_shape.1} parent=1 // pred_check
      _
    $region27: #{deep_sq_shape.1} parent=1 // pred_check_branch
      %217 = sbr.rel (0) target = $region29
    $region28: #{deep_sq_shape.1} parent=1 // pred_region
      %218 = dma.done [#allocation3], 128
    $region29: #{deep_sq_shape.1} parent=1 // pred_fallthru
      _
    %219 = vsyncpa [#allocation3], 1

</llo_original>
